<compile_context>
chip_gen: v7x
topology: tpu7x:2x2x1
jax: 0.10.0
libtpu: 0.0.40
codegen_flags: <defaults>
</compile_context>

<pallas_src>
import functools

import jax
import jax.numpy as jnp
from jax.experimental import pallas as pl
from jax.experimental.pallas import tpu as pltpu  # noqa: F401  (TPU backend)


def _round_up(n, m):
    return ((n + m - 1) // m) * m


def _gate_activations(gates, hidden_size):
    """PyTorch gate order (i, f, g, o). i/f/o = sigmoid, g = tanh.

    Activations are applied full-width over the (Bp, 4H) tile with a lane-mask
    select for the tanh quarter, avoiding per-quarter sub-vreg transcendentals.
    """
    H = hidden_size
    lane = jax.lax.broadcasted_iota(jnp.int32, gates.shape, 1)
    is_g = (lane >= 2 * H) & (lane < 3 * H)
    act = jnp.where(is_g, jnp.tanh(gates), jax.nn.sigmoid(gates))
    return (act[:, 0 * H:1 * H], act[:, 1 * H:2 * H],
            act[:, 2 * H:3 * H], act[:, 3 * H:4 * H])


def _store_outputs(out_ref, h1, c1, h2, c2, dense, hidden_size):
    H = hidden_size
    out_ref[:, 0 * H:1 * H] = h1
    out_ref[:, 1 * H:2 * H] = c1
    out_ref[:, 2 * H:3 * H] = h2
    out_ref[:, 3 * H:4 * H] = c2
    out_ref[:, 4 * H:] = dense


def _decoder_zero_hidden_kernel(x_ref, wih0_ref, b0_ref, wih1_ref, b1_ref,
                                wd_ref, bd_ref, out_ref, *, hidden_size):
    """Fused forward specialized for hidden=None (h0 == c0 == 0)."""
    H = hidden_size
    # Layer 0: h-term and f*c term vanish for zero initial state.
    g0 = jnp.dot(x_ref[...], wih0_ref[...],
                 preferred_element_type=jnp.float32) + b0_ref[...]
    i0, _, gg0, o0 = _gate_activations(g0, H)
    c1 = i0 * gg0
    h1 = o0 * jnp.tanh(c1)
    # (inter-layer dropout == identity in eval mode)
    # Layer 1 (zero initial state as well).
    g1 = jnp.dot(h1, wih1_ref[...],
                 preferred_element_type=jnp.float32) + b1_ref[...]
    i1, _, gg1, o1 = _gate_activations(g1, H)
    c2 = i1 * gg1
    h2 = o1 * jnp.tanh(c2)
    # Dense + ReLU.
    d = jnp.maximum(
        jnp.dot(h2, wd_ref[...], preferred_element_type=jnp.float32)
        + bd_ref[...], 0.0)
    _store_outputs(out_ref, h1, c1, h2, c2, d, H)


def _decoder_kernel(xh0_ref, c00_ref, h01_ref, c01_ref,
                    w0_ref, b0_ref, wih1_ref, whh1_ref, b1_ref,
                    wd_ref, bd_ref, out_ref, *, hidden_size):
    """Fused forward with a provided (h0, c0) initial state."""
    H = hidden_size
    # Layer 0: single fused matmul of [x | h0_l0] against [Wih0^T ; Whh0^T].
    g0 = jnp.dot(xh0_ref[...], w0_ref[...],
                 preferred_element_type=jnp.float32) + b0_ref[...]
    i0, f0, gg0, o0 = _gate_activations(g0, H)
    c1 = f0 * c00_ref[...] + i0 * gg0
    h1 = o0 * jnp.tanh(c1)
    # (inter-layer dropout == identity in eval mode)
    # Layer 1: h1 is produced in-kernel, so keep two dots here (an in-kernel
    # lane concat of [h1 | h0_l1] would cost about as much as the saved dot).
    g1 = (jnp.dot(h1, wih1_ref[...], preferred_element_type=jnp.float32)
          + jnp.dot(h01_ref[...], whh1_ref[...],
                    preferred_element_type=jnp.float32)
          + b1_ref[...])
    i1, f1, gg1, o1 = _gate_activations(g1, H)
    c2 = f1 * c01_ref[...] + i1 * gg1
    h2 = o1 * jnp.tanh(c2)
    d = jnp.maximum(
        jnp.dot(h2, wd_ref[...], preferred_element_type=jnp.float32)
        + bd_ref[...], 0.0)
    _store_outputs(out_ref, h1, c1, h2, c2, d, H)


def init_decoder_params(key, input_size, hidden_size, output_size):
    """Deterministic init matching nn.LSTM(2 layers) + nn.Linear shapes."""
    H = hidden_size
    O = output_size
    O_pad = _round_up(O, 128)                # lane-dense dense output
    bound = 1.0 / jnp.sqrt(jnp.float32(H))
    params = {"input_size": input_size, "hidden_size": H,
              "output_size": O, "out_pad": O_pad}
    dims_in = [input_size, H]                # layer0 eats x, layer1 eats h1
    for layer in range(2):
        key, k1, k2, k3, k4 = jax.random.split(key, 5)
        d_in = dims_in[layer]
        w_ih = jax.random.uniform(k1, (4 * H, d_in), jnp.float32, -bound, bound)
        w_hh = jax.random.uniform(k2, (4 * H, H), jnp.float32, -bound, bound)
        b_ih = jax.random.uniform(k3, (4 * H,), jnp.float32, -bound, bound)
        b_hh = jax.random.uniform(k4, (4 * H,), jnp.float32, -bound, bound)
        params[f"wih{layer}_t"] = w_ih.T                 # (d_in, 4H)
        params[f"whh{layer}_t"] = w_hh.T                 # (H, 4H)
        params[f"b{layer}"] = (b_ih + b_hh)[None, :]     # (1, 4H)
    # Stacked layer-0 weight for the general-hidden path: [Wih0^T ; Whh0^T].
    params["w0_stk"] = jnp.concatenate(
        [params["wih0_t"], params["whh0_t"]], axis=0)    # (d_in + H, 4H)
    # Dense nn.Linear(H, O), columns zero-padded to O_pad (relu(0)=0, sliced).
    key, kd1, kd2 = jax.random.split(key, 3)
    w_d = jax.random.uniform(kd1, (O, H), jnp.float32, -bound, bound)
    b_d = jax.random.uniform(kd2, (O,), jnp.float32, -bound, bound)
    params["wd_t_pad"] = jnp.zeros((H, O_pad), jnp.float32).at[:, :O].set(w_d.T)
    params["bd_pad"] = jnp.zeros((1, O_pad), jnp.float32).at[:, :O].set(b_d)
    return params


def decoder_forward(params, x, hidden=None):
    """Replicates Decoder.forward(x, hidden=None).

    x: (B, input_size) float32
    hidden: None or (h0, c0) each (2, B, H)
    returns (decoder_out, (h_n, c_n)):
        decoder_out: (B, output_size)
        h_n, c_n:    (2, B, H)
    """
    H = params["hidden_size"]
    O = params["output_size"]
    O_pad = params["out_pad"]
    B, D_in = x.shape
    Bp = _round_up(max(B, 8), 8)             # keep all 8 sublanes busy

    x_p = x.astype(jnp.float32)
    if Bp != B:
        x_p = jnp.zeros((Bp, D_in), jnp.float32).at[:B].set(x_p)

    full = lambda a: pl.BlockSpec(a.shape, lambda: (0,) * a.ndim)
    slab_w = 4 * H + O_pad

    if hidden is None:
        kernel = functools.partial(_decoder_zero_hidden_kernel, hidden_size=H)
        operands = (x_p, params["wih0_t"], params["b0"],
                    params["wih1_t"], params["b1"],
                    params["wd_t_pad"], params["bd_pad"])
    else:
        h0, c0 = hidden
        h0 = h0.astype(jnp.float32)
        c0 = c0.astype(jnp.float32)
        if Bp != B:
            h0 = jnp.zeros((2, Bp, H), jnp.float32).at[:, :B].set(h0)
            c0 = jnp.zeros((2, Bp, H), jnp.float32).at[:, :B].set(c0)
        xh0 = jnp.concatenate([x_p, h0[0]], axis=1)      # (Bp, D_in + H)
        kernel = functools.partial(_decoder_kernel, hidden_size=H)
        operands = (xh0, c0[0], h0[1], c0[1],
                    params["w0_stk"], params["b0"],
                    params["wih1_t"], params["whh1_t"], params["b1"],
                    params["wd_t_pad"], params["bd_pad"])

    slab = pl.pallas_call(
        kernel,
        out_shape=jax.ShapeDtypeStruct((Bp, slab_w), jnp.float32),
        grid=(),
        in_specs=[full(a) for a in operands],
        out_specs=pl.BlockSpec((Bp, slab_w), lambda: (0, 0)),
    )(*operands)

    h1 = slab[:B, 0 * H:1 * H]
    c1 = slab[:B, 1 * H:2 * H]
    h2 = slab[:B, 2 * H:3 * H]
    c2 = slab[:B, 3 * H:4 * H]
    decoder_out = slab[:B, 4 * H:4 * H + O]              # relu already applied
    h_n = jnp.stack([h1, h2], axis=0)                    # (2, B, H)
    c_n = jnp.stack([c1, c2], axis=0)                    # (2, B, H)
    return decoder_out, (h_n, c_n)


if __name__ == "__main__":
    INPUT_SIZE = 16
    HIDDEN_SIZE = 32
    OUTPUT_SIZE = 16
    BATCH = 2

    key = jax.random.PRNGKey(0)
    key, kx, kh, kc = jax.random.split(key, 4)
    x = jax.random.normal(kx, (BATCH, INPUT_SIZE), jnp.float32)

    params = init_decoder_params(key, INPUT_SIZE, HIDDEN_SIZE, OUTPUT_SIZE)

    # Path 1: hidden=None (forward default) -> specialized zero-state kernel.
    out0, (h_n0, c_n0) = decoder_forward(params, x, hidden=None)

    # Path 2: explicit (h0, c0) -> general fused kernel.
    h0 = jax.random.normal(kh, (2, BATCH, HIDDEN_SIZE), jnp.float32)
    c0 = jax.random.normal(kc, (2, BATCH, HIDDEN_SIZE), jnp.float32)
    out1, (h_n1, c_n1) = decoder_forward(params, x, hidden=(h0, c0))

    jax.block_until_ready((out0, h_n0, c_n0, out1, h_n1, c_n1))

    assert out0.shape == (BATCH, OUTPUT_SIZE)
    assert h_n0.shape == (2, BATCH, HIDDEN_SIZE)
    assert c_n0.shape == (2, BATCH, HIDDEN_SIZE)
    assert out1.shape == (BATCH, OUTPUT_SIZE)
    assert h_n1.shape == (2, BATCH, HIDDEN_SIZE)
    assert c_n1.shape == (2, BATCH, HIDDEN_SIZE)
    assert bool(jnp.all(out0 >= 0.0)) and bool(jnp.all(out1 >= 0.0))  # ReLU
    print("KERNEL_OK")
</pallas_src>

<mosaic_0001>
module attributes {stable_mosaic.version = 11 : i64} {
  func.func @_decoder_zero_hidden_kernel(%arg0: memref<8x16xf32, #tpu.memory_space<vmem>>, %arg1: memref<16x128xf32, #tpu.memory_space<vmem>>, %arg2: memref<1x128xf32, #tpu.memory_space<vmem>>, %arg3: memref<32x128xf32, #tpu.memory_space<vmem>>, %arg4: memref<1x128xf32, #tpu.memory_space<vmem>>, %arg5: memref<32x128xf32, #tpu.memory_space<vmem>>, %arg6: memref<1x128xf32, #tpu.memory_space<vmem>>, %arg7: memref<8x256xf32, #tpu.memory_space<vmem>>) attributes {dimension_semantics = [], scalar_prefetch = 0 : i64, scratch_operands = 0 : i64, tpu.core_type = #tpu.core_type<tc>} {
    %c0 = arith.constant 0 : index
    %c0_0 = arith.constant 0 : index
    %0 = vector.load %arg0[%c0, %c0_0] : memref<8x16xf32, #tpu.memory_space<vmem>>, vector<8x16xf32>
    %c0_1 = arith.constant 0 : index
    %c0_2 = arith.constant 0 : index
    %1 = vector.load %arg1[%c0_1, %c0_2] : memref<16x128xf32, #tpu.memory_space<vmem>>, vector<16x128xf32>
    %cst = arith.constant dense<0.000000e+00> : vector<8x128xf32>
    %2 = tpu.matmul %0, %1, %cst {dimension_numbers = #tpu.dot_dimension_numbers<[1], [0], [0], [1], [0, 0, 1, 1], [], []>} : vector<8x16xf32>, vector<16x128xf32>, vector<8x128xf32> -> vector<8x128xf32>
    %c0_3 = arith.constant 0 : index
    %c0_4 = arith.constant 0 : index
    %3 = vector.load %arg2[%c0_3, %c0_4] : memref<1x128xf32, #tpu.memory_space<vmem>>, vector<1x128xf32>
    %4 = vector.broadcast %3 : vector<1x128xf32> to vector<8x128xf32>
    %5 = arith.addf %2, %4 : vector<8x128xf32>
    %6 = tpu.iota {dimensions = array<i32: 1>} : vector<8x128xi32>
    %c64_i32 = arith.constant 64 : i32
    %7 = vector.broadcast %c64_i32 : i32 to vector<8x128xi32>
    %8 = arith.cmpi sge, %6, %7 : vector<8x128xi32>
    %c96_i32 = arith.constant 96 : i32
    %9 = vector.broadcast %c96_i32 : i32 to vector<8x128xi32>
    %10 = arith.cmpi slt, %6, %9 : vector<8x128xi32>
    %11 = arith.andi %8, %10 : vector<8x128xi1>
    %12 = math.tanh %5 : vector<8x128xf32>
    %13 = arith.negf %5 : vector<8x128xf32>
    %14 = math.exp %13 : vector<8x128xf32>
    %cst_5 = arith.constant 1.000000e+00 : f32
    %15 = vector.broadcast %cst_5 : f32 to vector<8x128xf32>
    %16 = arith.addf %15, %14 : vector<8x128xf32>
    %17 = arith.divf %15, %16 : vector<8x128xf32>
    %18 = arith.select %11, %12, %17 : vector<8x128xi1>, vector<8x128xf32>
    %19 = vector.extract_strided_slice %18 {offsets = [0, 0], sizes = [8, 32], strides = [1, 1]} : vector<8x128xf32> to vector<8x32xf32>
    %20 = vector.extract_strided_slice %18 {offsets = [0, 64], sizes = [8, 32], strides = [1, 1]} : vector<8x128xf32> to vector<8x32xf32>
    %21 = vector.extract_strided_slice %18 {offsets = [0, 96], sizes = [8, 32], strides = [1, 1]} : vector<8x128xf32> to vector<8x32xf32>
    %22 = arith.mulf %19, %20 : vector<8x32xf32>
    %23 = math.tanh %22 : vector<8x32xf32>
    %24 = arith.mulf %21, %23 : vector<8x32xf32>
    %c0_6 = arith.constant 0 : index
    %c0_7 = arith.constant 0 : index
    %25 = vector.load %arg3[%c0_6, %c0_7] : memref<32x128xf32, #tpu.memory_space<vmem>>, vector<32x128xf32>
    %cst_8 = arith.constant dense<0.000000e+00> : vector<8x128xf32>
    %26 = tpu.matmul %24, %25, %cst_8 {dimension_numbers = #tpu.dot_dimension_numbers<[1], [0], [0], [1], [0, 0, 1, 1], [], []>} : vector<8x32xf32>, vector<32x128xf32>, vector<8x128xf32> -> vector<8x128xf32>
    %c0_9 = arith.constant 0 : index
    %c0_10 = arith.constant 0 : index
    %27 = vector.load %arg4[%c0_9, %c0_10] : memref<1x128xf32, #tpu.memory_space<vmem>>, vector<1x128xf32>
    %28 = vector.broadcast %27 : vector<1x128xf32> to vector<8x128xf32>
    %29 = arith.addf %26, %28 : vector<8x128xf32>
    %30 = tpu.iota {dimensions = array<i32: 1>} : vector<8x128xi32>
    %c64_i32_11 = arith.constant 64 : i32
    %31 = vector.broadcast %c64_i32_11 : i32 to vector<8x128xi32>
    %32 = arith.cmpi sge, %30, %31 : vector<8x128xi32>
    %c96_i32_12 = arith.constant 96 : i32
    %33 = vector.broadcast %c96_i32_12 : i32 to vector<8x128xi32>
    %34 = arith.cmpi slt, %30, %33 : vector<8x128xi32>
    %35 = arith.andi %32, %34 : vector<8x128xi1>
    %36 = math.tanh %29 : vector<8x128xf32>
    %37 = arith.negf %29 : vector<8x128xf32>
    %38 = math.exp %37 : vector<8x128xf32>
    %cst_13 = arith.constant 1.000000e+00 : f32
    %39 = vector.broadcast %cst_13 : f32 to vector<8x128xf32>
    %40 = arith.addf %39, %38 : vector<8x128xf32>
    %41 = arith.divf %39, %40 : vector<8x128xf32>
    %42 = arith.select %35, %36, %41 : vector<8x128xi1>, vector<8x128xf32>
    %43 = vector.extract_strided_slice %42 {offsets = [0, 0], sizes = [8, 32], strides = [1, 1]} : vector<8x128xf32> to vector<8x32xf32>
    %44 = vector.extract_strided_slice %42 {offsets = [0, 64], sizes = [8, 32], strides = [1, 1]} : vector<8x128xf32> to vector<8x32xf32>
    %45 = vector.extract_strided_slice %42 {offsets = [0, 96], sizes = [8, 32], strides = [1, 1]} : vector<8x128xf32> to vector<8x32xf32>
    %46 = arith.mulf %43, %44 : vector<8x32xf32>
    %47 = math.tanh %46 : vector<8x32xf32>
    %48 = arith.mulf %45, %47 : vector<8x32xf32>
    %c0_14 = arith.constant 0 : index
    %c0_15 = arith.constant 0 : index
    %49 = vector.load %arg5[%c0_14, %c0_15] : memref<32x128xf32, #tpu.memory_space<vmem>>, vector<32x128xf32>
    %cst_16 = arith.constant dense<0.000000e+00> : vector<8x128xf32>
    %50 = tpu.matmul %48, %49, %cst_16 {dimension_numbers = #tpu.dot_dimension_numbers<[1], [0], [0], [1], [0, 0, 1, 1], [], []>} : vector<8x32xf32>, vector<32x128xf32>, vector<8x128xf32> -> vector<8x128xf32>
    %c0_17 = arith.constant 0 : index
    %c0_18 = arith.constant 0 : index
    %51 = vector.load %arg6[%c0_17, %c0_18] : memref<1x128xf32, #tpu.memory_space<vmem>>, vector<1x128xf32>
    %52 = vector.broadcast %51 : vector<1x128xf32> to vector<8x128xf32>
    %53 = arith.addf %50, %52 : vector<8x128xf32>
    %cst_19 = arith.constant 0.000000e+00 : f32
    %54 = vector.broadcast %cst_19 : f32 to vector<8x128xf32>
    %55 = arith.maximumf %53, %54 : vector<8x128xf32>
    %c0_20 = arith.constant 0 : index
    %c0_21 = arith.constant 0 : index
    %56 = vector.load %arg7[%c0_20, %c0_21] : memref<8x256xf32, #tpu.memory_space<vmem>>, vector<8x32xf32>
    tpu.vector_store %arg7[%c0_20, %c0_21], %24 {strides = array<i32>} : memref<8x256xf32, #tpu.memory_space<vmem>>, vector<8x32xf32>,
    %c0_22 = arith.constant 0 : index
    %c32 = arith.constant 32 : index
    %57 = vector.load %arg7[%c0_22, %c32] : memref<8x256xf32, #tpu.memory_space<vmem>>, vector<8x32xf32>
    tpu.vector_store %arg7[%c0_22, %c32], %22 {strides = array<i32>} : memref<8x256xf32, #tpu.memory_space<vmem>>, vector<8x32xf32>,
    %c0_23 = arith.constant 0 : index
    %c64 = arith.constant 64 : index
    %58 = vector.load %arg7[%c0_23, %c64] : memref<8x256xf32, #tpu.memory_space<vmem>>, vector<8x32xf32>
    tpu.vector_store %arg7[%c0_23, %c64], %48 {strides = array<i32>} : memref<8x256xf32, #tpu.memory_space<vmem>>, vector<8x32xf32>,
    %c0_24 = arith.constant 0 : index
    %c96 = arith.constant 96 : index
    %59 = vector.load %arg7[%c0_24, %c96] : memref<8x256xf32, #tpu.memory_space<vmem>>, vector<8x32xf32>
    tpu.vector_store %arg7[%c0_24, %c96], %46 {strides = array<i32>} : memref<8x256xf32, #tpu.memory_space<vmem>>, vector<8x32xf32>,
    %c0_25 = arith.constant 0 : index
    %c128 = arith.constant 128 : index
    %60 = vector.load %arg7[%c0_25, %c128] : memref<8x256xf32, #tpu.memory_space<vmem>>, vector<8x128xf32>
    tpu.vector_store %arg7[%c0_25, %c128], %55 {strides = array<i32>} : memref<8x256xf32, #tpu.memory_space<vmem>>, vector<8x128xf32>,
    return
  }
}

</mosaic_0001>

<llo_original>
// kernel: tpu_custom_call.1
$region0: #{tpu_custom_call.1}
  #allocation0 [shape = 'u32[]', space=smem, size = 0x4, offset = 0x4, fixed_abs, tag = 'smem constant byte address 0x4 - core index']
  #allocation1 [shape = 'u32[144,128]{1,0:T(1,128)}', space=vmem, size = 0x12000, scoped, tag = 'internal scratch']
  %s0 = inlined_call_operand.hbm [shape: f32[8,16], index: 0, kind: input, shape index: {}]
  %s1 = inlined_call_operand.hbm [shape: f32[16,128], index: 1, kind: input, shape index: {}]
  %s2 = inlined_call_operand.vmem [shape: f32[1,128], index: 2, kind: input, shape index: {}]
  %s3 = inlined_call_operand.hbm [shape: f32[32,128], index: 3, kind: input, shape index: {}]
  %s4 = inlined_call_operand.vmem [shape: f32[1,128], index: 4, kind: input, shape index: {}]
  %s5 = inlined_call_operand.hbm [shape: f32[32,128], index: 5, kind: input, shape index: {}]
  %s6 = inlined_call_operand.vmem [shape: f32[1,128], index: 6, kind: input, shape index: {}]
  %s7 = inlined_call_operand.hbm [shape: f32[8,256], index: 7, kind: output, shape index: {}]
  %s8 = sld [smem:[#allocation0]]
  $region54: #{tpu_custom_call.1} parent=0
    _
  %s10 = ssub.s32 1, %s8
  %s11 = scalar_select 0, %s10, %s8
  $region1: #{tpu_custom_call.1} parent=0
    #allocation2 [shape = 'u8[4096]{0}', space=vmem, size = 0x1000, scoped, tag = 'input window, operand 0, single buffered']
    #allocation3 [shape = 's32[1]{0}', space=sflag, size = 0x4, scoped, tag = 'scoped memory for tpu_custom_call.1']
    #allocation4 [shape = 's32[1]{0}', space=sflag, size = 0x4, scoped, tag = 'scoped memory for tpu_custom_call.1']
    #allocation5 [shape = 'u8[8192]{0}', space=vmem, size = 0x2000, scoped, tag = 'input window, operand 1, single buffered']
    #allocation6 [shape = 's32[1]{0}', space=sflag, size = 0x4, scoped, tag = 'scoped memory for tpu_custom_call.1']
    #allocation7 [shape = 'u8[16384]{0}', space=vmem, size = 0x4000, scoped, tag = 'input window, operand 3, single buffered']
    #allocation8 [shape = 'u8[16384]{0}', space=vmem, size = 0x4000, scoped, tag = 'input window, operand 5, single buffered']
    #allocation9 [shape = 's32[1]{0}', space=sflag, size = 0x4, scoped, tag = 'scoped memory for tpu_custom_call.1']
    #allocation10 [shape = 'u8[8192]{0}', space=vmem, size = 0x2000, scoped, tag = 'output window, operand 0, single buffered']
    %12 = vsyncpa [#allocation3], 0
    %13 = vsyncpa [#allocation6], 0
    %14 = vsyncpa [#allocation9], 0
    %15 = vsyncpa [#allocation4], 0
    // Predicated region
    $region2: #{tpu_custom_call.1} parent=1 // pred_check
      _
    $region3: #{tpu_custom_call.1} parent=1 // pred_check_branch
      %17 = sbr.rel (0) target = $region5
    $region4: #{tpu_custom_call.1} parent=1 // pred_region
      %s19 = ssub.s32 128, 128
      %20 = vsyncadd [#allocation3], %s19
      %s22 = sshll.u32 [#allocation2], 4
      %s23 = int_to_ptr.vmem [resolvable:$true] %s22
      %25 = dma.hbm_to_vmem [thread:$0]  %s0, 128, %s23, [#allocation3]
    $region5: #{tpu_custom_call.1} parent=1 // pred_fallthru
      _
    // Predicated region
    $region6: #{tpu_custom_call.1} parent=1 // pred_check
      _
    $region7: #{tpu_custom_call.1} parent=1 // pred_check_branch
      %27 = sbr.rel (0) target = $region9
    $region8: #{tpu_custom_call.1} parent=1 // pred_region
      %s29 = ssub.s32 256, 256
      %30 = vsyncadd [#allocation6], %s29
      %s31 = sshll.u32 [#allocation5], 4
      %s32 = int_to_ptr.vmem [resolvable:$true] %s31
      %37 = dma.hbm_to_vmem [thread:$0]  %s1, 256, %s32, [#allocation6], 128, 128, 8
    $region9: #{tpu_custom_call.1} parent=1 // pred_fallthru
      _
    // Predicated region
    $region10: #{tpu_custom_call.1} parent=1 // pred_check
      _
    $region11: #{tpu_custom_call.1} parent=1 // pred_check_branch
      %39 = sbr.rel (0) target = $region13
    $region12: #{tpu_custom_call.1} parent=1 // pred_region
      _
    $region13: #{tpu_custom_call.1} parent=1 // pred_fallthru
      _
    // Predicated region
    $region14: #{tpu_custom_call.1} parent=1 // pred_check
      _
    $region15: #{tpu_custom_call.1} parent=1 // pred_check_branch
      %41 = sbr.rel (0) target = $region17
    $region16: #{tpu_custom_call.1} parent=1 // pred_region
      %s43 = ssub.s32 512, 512
      %44 = vsyncadd [#allocation6], %s43
      %s45 = sshll.u32 [#allocation7], 4
      %s46 = int_to_ptr.vmem [resolvable:$true] %s45
      %51 = dma.hbm_to_vmem [thread:$0]  %s3, 512, %s46, [#allocation6], 128, 128, 8
    $region17: #{tpu_custom_call.1} parent=1 // pred_fallthru
      _
    // Predicated region
    $region18: #{tpu_custom_call.1} parent=1 // pred_check
      _
    $region19: #{tpu_custom_call.1} parent=1 // pred_check_branch
      %53 = sbr.rel (0) target = $region21
    $region20: #{tpu_custom_call.1} parent=1 // pred_region
      _
    $region21: #{tpu_custom_call.1} parent=1 // pred_fallthru
      _
    // Predicated region
    $region22: #{tpu_custom_call.1} parent=1 // pred_check
      _
    $region23: #{tpu_custom_call.1} parent=1 // pred_check_branch
      %55 = sbr.rel (0) target = $region25
    $region24: #{tpu_custom_call.1} parent=1 // pred_region
      %s57 = ssub.s32 512, 512
      %58 = vsyncadd [#allocation9], %s57
      %s59 = sshll.u32 [#allocation8], 4
      %s60 = int_to_ptr.vmem [resolvable:$true] %s59
      %65 = dma.hbm_to_vmem [thread:$0]  %s5, 512, %s60, [#allocation9], 128, 128, 8
    $region25: #{tpu_custom_call.1} parent=1 // pred_fallthru
      _
    // Predicated region
    $region26: #{tpu_custom_call.1} parent=1 // pred_check
      _
    $region27: #{tpu_custom_call.1} parent=1 // pred_check_branch
      %67 = sbr.rel (0) target = $region29
    $region28: #{tpu_custom_call.1} parent=1 // pred_region
      _
    $region29: #{tpu_custom_call.1} parent=1 // pred_fallthru
      _
    // Predicated region
    $region30: #{tpu_custom_call.1} parent=1 // pred_check
      _
    $region31: #{tpu_custom_call.1} parent=1 // pred_check_branch
      %69 = sbr.rel (0) target = $region33
    $region32: #{tpu_custom_call.1} parent=1 // pred_region
      %70 = dma.done [#allocation3], 128
    $region33: #{tpu_custom_call.1} parent=1 // pred_fallthru
      _
    // Predicated region
    $region34: #{tpu_custom_call.1} parent=1 // pred_check
      _
    $region35: #{tpu_custom_call.1} parent=1 // pred_check_branch
      %72 = sbr.rel (0) target = $region37
    $region36: #{tpu_custom_call.1} parent=1 // pred_region
      %73 = dma.done [#allocation6], 256
    $region37: #{tpu_custom_call.1} parent=1 // pred_fallthru
      _
    // Predicated region
    $region38: #{tpu_custom_call.1} parent=1 // pred_check
      _
    $region39: #{tpu_custom_call.1} parent=1 // pred_check_branch
      %75 = sbr.rel (0) target = $region41
    $region40: #{tpu_custom_call.1} parent=1 // pred_region
      %76 = dma.done [#allocation6], 512
    $region41: #{tpu_custom_call.1} parent=1 // pred_fallthru
      _
    // Predicated region
    $region42: #{tpu_custom_call.1} parent=1 // pred_check
      _
    $region43: #{tpu_custom_call.1} parent=1 // pred_check_branch
      %78 = sbr.rel (0) target = $region45
    $region44: #{tpu_custom_call.1} parent=1 // pred_region
      %79 = dma.done [#allocation9], 512
    $region45: #{tpu_custom_call.1} parent=1 // pred_fallthru
      _
    %v80 = vld [vmem:[#allocation2] sm:$0xff]
    %v81 = vld [vmem:[#allocation5] sm:$0xff]
    %v82 = vld [vmem:[#allocation5 + $0x8] sm:$0xff]
    %v83 = vld [vmem:[%s2] sm:$0x1]
    %v85 = vlaneseq
    %v86 = vshrl.u32 %v85, 7
    %v87 = vsub.s32 0, %v86
    %v88 = vrot.slane %v83, %v87
    %vm90 = vcmask 130048
    %v92 = vsel %vm90, %v80, 0
    %94 = vmatprep.subr.mxu0 0.0
    %95 = vmatpush1.msra.mxu0 %v81
    %96 = vmatprep.subr.mxu0 0.0
    %97 = vmatpush1.msra.mxu0 %v82
    %98 = vmatprep.subr.mxu0 0.0
    %99 = vmatpush1.msra.mxu0 0.0
    %100 = vmatprep.subr.mxu0 0.0
    %101 = vmatpush1.msra.mxu0 0.0
    %102 = vmatprep.subr.mxu0 0.0
    %103 = vmatpush1.msra.mxu0 0.0
    %104 = vmatprep.subr.mxu0 0.0
    %105 = vmatpush1.msra.mxu0 0.0
    %106 = vmatprep.subr.mxu0 0.0
    %107 = vmatpush1.msra.mxu0 0.0
    %108 = vmatprep.subr.mxu0 0.0
    %109 = vmatpush1.msra.mxu0 0.0
    %110 = vmatprep.subr.mxu0 0.0
    %111 = vmatpush1.msra.mxu0 0.0
    %112 = vmatprep.subr.mxu0 0.0
    %113 = vmatpush1.msra.mxu0 0.0
    %114 = vmatprep.subr.mxu0 0.0
    %115 = vmatpush1.msra.mxu0 0.0
    %116 = vmatprep.subr.mxu0 0.0
    %117 = vmatpush1.msra.mxu0 0.0
    %118 = vmatprep.subr.mxu0 0.0
    %119 = vmatpush1.msra.mxu0 0.0
    %120 = vmatprep.subr.mxu0 0.0
    %121 = vmatpush1.msra.mxu0 0.0
    %122 = vmatprep.subr.mxu0 0.0
    %123 = vmatpush1.msra.mxu0 0.0
    %124 = vmatprep.subr.mxu0 0.0
    %125 = vmatpush1.msra.mxu0 0.0
    %126 = vmatprep.subr.mxu0 0.0
    %127 = vmatpush1.msra.mxu0 0.0
    %128 = vmatprep.subr.mxu0 0.0
    %129 = vmatpush1.msra.mxu0 0.0
    %130 = vmatprep.subr.mxu0 0.0
    %131 = vmatpush1.msra.mxu0 0.0
    %132 = vmatprep.subr.mxu0 0.0
    %133 = vmatpush1.msra.mxu0 0.0
    %134 = vmatprep.subr.mxu0 0.0
    %135 = vmatpush1.msra.mxu0 0.0
    %136 = vmatprep.subr.mxu0 0.0
    %137 = vmatpush1.msra.mxu0 0.0
    %138 = vmatprep.subr.mxu0 0.0
    %139 = vmatpush1.msra.mxu0 0.0
    %140 = vmatprep.subr.mxu0 0.0
    %141 = vmatpush1.msra.mxu0 0.0
    %142 = vmatprep.subr.mxu0 0.0
    %143 = vmatpush1.msra.mxu0 0.0
    %144 = vmatprep.subr.mxu0 0.0
    %145 = vmatpush1.msra.mxu0 0.0
    %146 = vmatprep.subr.mxu0 0.0
    %147 = vmatpush1.msra.mxu0 0.0
    %148 = vmatprep.subr.mxu0 0.0
    %149 = vmatpush1.msra.mxu0 0.0
    %150 = vmatprep.subr.mxu0 0.0
    %151 = vmatpush1.msra.mxu0 0.0
    %152 = vmatprep.subr.mxu0 0.0
    %153 = vmatpush1.msra.mxu0 0.0
    %154 = vmatprep.subr.mxu0 0.0
    %155 = vmatpush1.msra.mxu0 0.0
    %156 = vmatprep.subr.mxu0 0.0
    %157 = vmatpush1.msra.mxu0 0.0
    %158 = vmatprep.mubr.f32.mxu0 0.0
    %159 = vmatmul.mubr.f32.gmra.mrb[0].mxu0 %v92
    %v160 = vpop.f32.mrb[0].mxu0
    %v161 = vadd.f32 %v88, %v160
    %v162 = vpop.f32.mrb[0].mxu0
    %163 = vdwg.mxu0
    %v164 = vlaneseq
    %v165 = vand.u32 %v164, 127
    %vm166 = vcmp.ge.s32.totalorder %v165, 64
    %vm167 = vcmp.lt.s32.totalorder %v165, 96
    %vm168 = vmand %vm166, %vm167
    %v169 = vtanh.pop %v161
    %v170 = vxor.u32 %v161, 2147483648
    %v171 = vmul.f32 %v170, 1.442695
    %v172 = vpow.pop %v171
    %v173 = vadd.f32 %v172, 1.0
    %v174 = vrcp.pop %v173
    %v175 = vmul.f32 1.0, %v174
    %v176 = vsel %vm168, %v169, %v175
    %178 = vrot.lane.b32.xlu0 %v176, 64
    %v179 = vpop.permute.xlu0 %178
    %v181 = vmul.f32 %v176, %v179
    %v182 = vtanh.pop %v181
    %184 = vrot.lane.b32.xlu0 %v182, 96
    %v185 = vpop.permute.xlu0 %184
    %v187 = vmul.f32 %v176, %v185
    %v188 = vld [vmem:[#allocation7] sm:$0xff]
    %v189 = vld [vmem:[#allocation7 + $0x8] sm:$0xff]
    %v190 = vld [vmem:[#allocation7 + $0x10] sm:$0xff]
    %v191 = vld [vmem:[#allocation7 + $0x18] sm:$0xff]
    %v192 = vld [vmem:[%s4] sm:$0x1]
    %v194 = vlaneseq
    %v195 = vshrl.u32 %v194, 7
    %v196 = vsub.s32 0, %v195
    %v197 = vrot.slane %v192, %v196
    %200 = vrot.lane.b32.xlu0 %v187, 32
    %v201 = vpop.permute.xlu0 %200
    %vm202 = vcmask 261120
    %v203 = vsel %vm202, %v201, 0
    %205 = vmatprep.subr.mxu0 0.0
    %206 = vmatpush1.msra.mxu0 %v188
    %207 = vmatprep.subr.mxu0 0.0
    %208 = vmatpush1.msra.mxu0 %v189
    %209 = vmatprep.subr.mxu0 0.0
    %210 = vmatpush1.msra.mxu0 %v190
    %211 = vmatprep.subr.mxu0 0.0
    %212 = vmatpush1.msra.mxu0 %v191
    %213 = vmatprep.subr.mxu0 0.0
    %214 = vmatpush1.msra.mxu0 0.0
    %215 = vmatprep.subr.mxu0 0.0
    %216 = vmatpush1.msra.mxu0 0.0
    %217 = vmatprep.subr.mxu0 0.0
    %218 = vmatpush1.msra.mxu0 0.0
    %219 = vmatprep.subr.mxu0 0.0
    %220 = vmatpush1.msra.mxu0 0.0
    %221 = vmatprep.subr.mxu0 0.0
    %222 = vmatpush1.msra.mxu0 0.0
    %223 = vmatprep.subr.mxu0 0.0
    %224 = vmatpush1.msra.mxu0 0.0
    %225 = vmatprep.subr.mxu0 0.0
    %226 = vmatpush1.msra.mxu0 0.0
    %227 = vmatprep.subr.mxu0 0.0
    %228 = vmatpush1.msra.mxu0 0.0
    %229 = vmatprep.subr.mxu0 0.0
    %230 = vmatpush1.msra.mxu0 0.0
    %231 = vmatprep.subr.mxu0 0.0
    %232 = vmatpush1.msra.mxu0 0.0
    %233 = vmatprep.subr.mxu0 0.0
    %234 = vmatpush1.msra.mxu0 0.0
    %235 = vmatprep.subr.mxu0 0.0
    %236 = vmatpush1.msra.mxu0 0.0
    %237 = vmatprep.subr.mxu0 0.0
    %238 = vmatpush1.msra.mxu0 0.0
    %239 = vmatprep.subr.mxu0 0.0
    %240 = vmatpush1.msra.mxu0 0.0
    %241 = vmatprep.subr.mxu0 0.0
    %242 = vmatpush1.msra.mxu0 0.0
    %243 = vmatprep.subr.mxu0 0.0
    %244 = vmatpush1.msra.mxu0 0.0
    %245 = vmatprep.subr.mxu0 0.0
    %246 = vmatpush1.msra.mxu0 0.0
    %247 = vmatprep.subr.mxu0 0.0
    %248 = vmatpush1.msra.mxu0 0.0
    %249 = vmatprep.subr.mxu0 0.0
    %250 = vmatpush1.msra.mxu0 0.0
    %251 = vmatprep.subr.mxu0 0.0
    %252 = vmatpush1.msra.mxu0 0.0
    %253 = vmatprep.subr.mxu0 0.0
    %254 = vmatpush1.msra.mxu0 0.0
    %255 = vmatprep.subr.mxu0 0.0
    %256 = vmatpush1.msra.mxu0 0.0
    %257 = vmatprep.subr.mxu0 0.0
    %258 = vmatpush1.msra.mxu0 0.0
    %259 = vmatprep.subr.mxu0 0.0
    %260 = vmatpush1.msra.mxu0 0.0
    %261 = vmatprep.subr.mxu0 0.0
    %262 = vmatpush1.msra.mxu0 0.0
    %263 = vmatprep.subr.mxu0 0.0
    %264 = vmatpush1.msra.mxu0 0.0
    %265 = vmatprep.subr.mxu0 0.0
    %266 = vmatpush1.msra.mxu0 0.0
    %267 = vmatprep.subr.mxu0 0.0
    %268 = vmatpush1.msra.mxu0 0.0
    %269 = vmatprep.mubr.f32.mxu0 0.0
    %270 = vmatmul.mubr.f32.gmra.mrb[0].mxu0 %v203
    %v271 = vpop.f32.mrb[0].mxu0
    %v272 = vadd.f32 %v197, %v271
    %v273 = vpop.f32.mrb[0].mxu0
    %274 = vdwg.mxu0
    %v275 = vtanh.pop %v272
    %v276 = vxor.u32 %v272, 2147483648
    %v277 = vmul.f32 %v276, 1.442695
    %v278 = vpow.pop %v277
    %v279 = vadd.f32 %v278, 1.0
    %v280 = vrcp.pop %v279
    %v281 = vmul.f32 1.0, %v280
    %v282 = vsel %vm168, %v275, %v281
    %284 = vrot.lane.b32.xlu0 %v282, 64
    %v285 = vpop.permute.xlu0 %284
    %v287 = vmul.f32 %v282, %v285
    %v288 = vtanh.pop %v287
    %290 = vrot.lane.b32.xlu0 %v288, 96
    %v291 = vpop.permute.xlu0 %290
    %v293 = vmul.f32 %v282, %v291
    %v294 = vld [vmem:[#allocation8] sm:$0xff]
    %v295 = vld [vmem:[#allocation8 + $0x8] sm:$0xff]
    %v296 = vld [vmem:[#allocation8 + $0x10] sm:$0xff]
    %v297 = vld [vmem:[#allocation8 + $0x18] sm:$0xff]
    %v298 = vld [vmem:[%s6] sm:$0x1]
    %v300 = vlaneseq
    %v301 = vshrl.u32 %v300, 7
    %v302 = vsub.s32 0, %v301
    %v303 = vrot.slane %v298, %v302
    %306 = vrot.lane.b32.xlu0 %v293, 32
    %v307 = vpop.permute.xlu0 %306
    %v308 = vsel %vm202, %v307, 0
    %310 = vmatprep.subr.mxu0 0.0
    %311 = vmatpush1.msra.mxu0 %v294
    %312 = vmatprep.subr.mxu0 0.0
    %313 = vmatpush1.msra.mxu0 %v295
    %314 = vmatprep.subr.mxu0 0.0
    %315 = vmatpush1.msra.mxu0 %v296
    %316 = vmatprep.subr.mxu0 0.0
    %317 = vmatpush1.msra.mxu0 %v297
    %318 = vmatprep.subr.mxu0 0.0
    %319 = vmatpush1.msra.mxu0 0.0
    %320 = vmatprep.subr.mxu0 0.0
    %321 = vmatpush1.msra.mxu0 0.0
    %322 = vmatprep.subr.mxu0 0.0
    %323 = vmatpush1.msra.mxu0 0.0
    %324 = vmatprep.subr.mxu0 0.0
    %325 = vmatpush1.msra.mxu0 0.0
    %326 = vmatprep.subr.mxu0 0.0
    %327 = vmatpush1.msra.mxu0 0.0
    %328 = vmatprep.subr.mxu0 0.0
    %329 = vmatpush1.msra.mxu0 0.0
    %330 = vmatprep.subr.mxu0 0.0
    %331 = vmatpush1.msra.mxu0 0.0
    %332 = vmatprep.subr.mxu0 0.0
    %333 = vmatpush1.msra.mxu0 0.0
    %334 = vmatprep.subr.mxu0 0.0
    %335 = vmatpush1.msra.mxu0 0.0
    %336 = vmatprep.subr.mxu0 0.0
    %337 = vmatpush1.msra.mxu0 0.0
    %338 = vmatprep.subr.mxu0 0.0
    %339 = vmatpush1.msra.mxu0 0.0
    %340 = vmatprep.subr.mxu0 0.0
    %341 = vmatpush1.msra.mxu0 0.0
    %342 = vmatprep.subr.mxu0 0.0
    %343 = vmatpush1.msra.mxu0 0.0
    %344 = vmatprep.subr.mxu0 0.0
    %345 = vmatpush1.msra.mxu0 0.0
    %346 = vmatprep.subr.mxu0 0.0
    %347 = vmatpush1.msra.mxu0 0.0
    %348 = vmatprep.subr.mxu0 0.0
    %349 = vmatpush1.msra.mxu0 0.0
    %350 = vmatprep.subr.mxu0 0.0
    %351 = vmatpush1.msra.mxu0 0.0
    %352 = vmatprep.subr.mxu0 0.0
    %353 = vmatpush1.msra.mxu0 0.0
    %354 = vmatprep.subr.mxu0 0.0
    %355 = vmatpush1.msra.mxu0 0.0
    %356 = vmatprep.subr.mxu0 0.0
    %357 = vmatpush1.msra.mxu0 0.0
    %358 = vmatprep.subr.mxu0 0.0
    %359 = vmatpush1.msra.mxu0 0.0
    %360 = vmatprep.subr.mxu0 0.0
    %361 = vmatpush1.msra.mxu0 0.0
    %362 = vmatprep.subr.mxu0 0.0
    %363 = vmatpush1.msra.mxu0 0.0
    %364 = vmatprep.subr.mxu0 0.0
    %365 = vmatpush1.msra.mxu0 0.0
    %366 = vmatprep.subr.mxu0 0.0
    %367 = vmatpush1.msra.mxu0 0.0
    %368 = vmatprep.subr.mxu0 0.0
    %369 = vmatpush1.msra.mxu0 0.0
    %370 = vmatprep.subr.mxu0 0.0
    %371 = vmatpush1.msra.mxu0 0.0
    %372 = vmatprep.subr.mxu0 0.0
    %373 = vmatpush1.msra.mxu0 0.0
    %374 = vmatprep.mubr.f32.mxu0 0.0
    %375 = vmatmul.mubr.f32.gmra.mrb[0].mxu0 %v308
    %v376 = vpop.f32.mrb[0].mxu0
    %v377 = vadd.f32 %v303, %v376
    %v378 = vpop.f32.mrb[0].mxu0
    %379 = vdwg.mxu0
    %v380 = vmax.f32 %v377, 0.0
    %382 = vst.msk [vmem:[#allocation10] sm:$0xff] %vm202, %v201
    %384 = vrot.lane.b32.xlu0 %v181, 32
    %v385 = vpop.permute.xlu0 %384
    %vm387 = vcmask 523520
    %388 = vst.msk [vmem:[#allocation10] sm:$0xff] %vm387, %v385
    %389 = vrot.lane.b32.xlu0 %v293, 96
    %v390 = vpop.permute.xlu0 %389
    %vm392 = vcmask 785920
    %393 = vst.msk [vmem:[#allocation10] sm:$0xff] %vm392, %v390
    %395 = vrot.lane.b32.xlu0 %v287, 96
    %v396 = vpop.permute.xlu0 %395
    %vm398 = vcmask 1048320
    %399 = vst.msk [vmem:[#allocation10] sm:$0xff] %vm398, %v396
    %400 = vst [vmem:[#allocation10 + $0x8] sm:$0xff] %v380
    // Predicated region
    $region46: #{tpu_custom_call.1} parent=1 // pred_check
      _
    $region47: #{tpu_custom_call.1} parent=1 // pred_check_branch
      %402 = sbr.rel (0) target = $region49
    $region48: #{tpu_custom_call.1} parent=1 // pred_region
      %s404 = ssub.s32 256, 256
      %405 = vsyncadd [#allocation4], %s404
      %s407 = sshll.u32 [#allocation10], 4
      %s408 = int_to_ptr.vmem [resolvable:$true] %s407
      %410 = dma.vmem_to_hbm [thread:$0]  %s408, 256, %s7, [#allocation4]
    $region49: #{tpu_custom_call.1} parent=1 // pred_fallthru
      _
    // Predicated region
    $region50: #{tpu_custom_call.1} parent=1 // pred_check
      _
    $region51: #{tpu_custom_call.1} parent=1 // pred_check_branch
      %412 = sbr.rel (0) target = $region53
    $region52: #{tpu_custom_call.1} parent=1 // pred_region
      %413 = dma.done [#allocation4], 256
    $region53: #{tpu_custom_call.1} parent=1 // pred_fallthru
      _
    %414 = vsyncpa [#allocation3], 1
    %415 = vsyncpa [#allocation6], 1
    %416 = vsyncpa [#allocation9], 1
    %417 = vsyncpa [#allocation4], 1

</llo_original>
